<compile_context>
chip_gen: v6e
topology: v6e:2x2x1
jax: 0.10.0
libtpu: 0.0.40
codegen_flags: <defaults>
</compile_context>

<pallas_src>
import jax
import jax.numpy as jnp
from jax.experimental import pallas as pl
from jax.experimental.pallas import tpu as pltpu

_LANE = 128   # lane width: pad feature dims to this
_SUB = 8      # sublane width: pad batch to a multiple of this


def _round_up(n, m):
    return ((n + m - 1) // m) * m


def _make_fused_net_kernel(num_layers):
    """Kernel over refs: (x, w0, b0, w1, b1, ..., out).

    Each w_l is pre-transposed+padded to (IN_p, OUT_p); b_l is (1, OUT_p).
    Intermediate activations stay as values (VMEM/vregs), never touch HBM.
    """

    def kernel(*refs):
        x_ref = refs[0]
        o_ref = refs[-1]
        h = x_ref[...].astype(jnp.float32)                     # (bb, D0_p)
        for l in range(num_layers):
            w_ref = refs[1 + 2 * l]                            # (Dl_p, Dl+1_p)
            b_ref = refs[2 + 2 * l]                            # (1, Dl+1_p)
            # Row L2-normalize, applied as a post-matmul per-row scale:
            #   (h * inv) @ W == (h @ W) * inv   (inv is a per-row scalar)
            # so the vmatmul can issue while the reduce/rsqrt complete.
            sq = jnp.sum(h * h, axis=1, keepdims=True)         # XLU reduce
            inv = jax.lax.rsqrt(jnp.maximum(sq, 1e-24))        # EUP rsqrt
            y = jnp.dot(h.astype(w_ref.dtype), w_ref[...],     # MXU
                        preferred_element_type=jnp.float32)
            y = y * inv + b_ref[...].astype(jnp.float32)
            h = jnp.maximum(y, 0.0)
        o_ref[...] = h.astype(o_ref.dtype)

    return kernel


class PallasNet:
    """Fused Net.forward on TPU.

    params: list of (w, b), w of shape (out, in) (PyTorch Linear layout),
            b of shape (out,).  Weight padding/transposition happens ONCE
            here; __call__ is a jitted wrapper around one pallas_call.
    """

    def __init__(self, params, *, block_b=512, matmul_dtype=jnp.float32):
        self.num_layers = len(params)
        self.dims = [params[0][0].shape[1]] + [w.shape[0] for (w, _) in params]
        self.dims_p = [_round_up(d, _LANE) for d in self.dims]
        self.block_b = block_b
        self.matmul_dtype = matmul_dtype

        # One-time weight prep: transpose to (IN, OUT) and zero-pad to lane
        # multiples (zeros are inert through normalize/matmul/bias/relu).
        self.packed = []
        for l, (w, b) in enumerate(params):
            out_f, in_f = w.shape
            wt = (jnp.zeros((self.dims_p[l], self.dims_p[l + 1]), matmul_dtype)
                  .at[:in_f, :out_f].set(w.T.astype(matmul_dtype)))
            bp = (jnp.zeros((1, self.dims_p[l + 1]), jnp.float32)
                  .at[:, :out_f].set(b.astype(jnp.float32)[None, :]))
            self.packed += [wt, bp]

        self._kernel = _make_fused_net_kernel(self.num_layers)
        self._jitted = jax.jit(self._forward)

    def _forward(self, x):
        # 1-D input case from the PyTorch code: normalize along dim 0, unsqueeze.
        if x.ndim == 1:
            x = x[None, :]
        x = x.astype(jnp.float32)
        B, in0 = x.shape
        assert in0 == self.dims[0]

        # Batch tile: as large as useful (256-512 rows), but never more than
        # the (sublane-rounded) batch itself for tiny inputs.
        bb = min(self.block_b, _round_up(B, _SUB))
        Bp = _round_up(B, bb)
        d0p, dLp = self.dims_p[0], self.dims_p[-1]

        xp = jnp.zeros((Bp, d0p), jnp.float32).at[:B, :in0].set(x)

        grid = (Bp // bb,)
        in_specs = [pl.BlockSpec((bb, d0p), lambda i: (i, 0))]
        for l in range(self.num_layers):
            in_specs.append(pl.BlockSpec(
                (self.dims_p[l], self.dims_p[l + 1]), lambda i: (0, 0)))
            in_specs.append(pl.BlockSpec(
                (1, self.dims_p[l + 1]), lambda i: (0, 0)))
        out_spec = pl.BlockSpec((bb, dLp), lambda i: (i, 0))

        # Explicit VMEM budget: resident weights/biases + double-buffered
        # x/out tiles + live activation values.  Only raise the scoped limit
        # when the estimate exceeds the most conservative default (16 MiB on
        # v5e); cap well under v7x's 64 MiB physical VMEM.
        weight_bytes = sum(int(p.size) * p.dtype.itemsize for p in self.packed)
        io_bytes = 2 * 2 * bb * (d0p + dLp) * 4
        act_bytes = 4 * bb * max(self.dims_p) * 4
        est_bytes = weight_bytes + io_bytes + act_bytes
        vmem_limit = None
        if est_bytes > 16 * 1024 * 1024:
            vmem_limit = min(int(est_bytes * 1.5), 100 * 1024 * 1024)

        out_p = pl.pallas_call(
            self._kernel,
            grid=grid,
            out_shape=jax.ShapeDtypeStruct((Bp, dLp), jnp.float32),
            in_specs=in_specs,
            out_specs=out_spec,
            compiler_params=pltpu.CompilerParams(
                dimension_semantics=("parallel",),
                vmem_limit_bytes=vmem_limit),
        )(xp, *self.packed)

        return out_p[:B, :self.dims[-1]]

    def __call__(self, x):
        return self._jitted(x)


def init_net_params(dims, key):
    """Deterministic nn.Linear-style init: U(-1/sqrt(in), 1/sqrt(in))."""
    params = []
    for d in range(len(dims) - 1):
        in_f, out_f = dims[d], dims[d + 1]
        key, kw, kb = jax.random.split(key, 3)
        bound = 1.0 / jnp.sqrt(jnp.float32(in_f))
        w = jax.random.uniform(kw, (out_f, in_f), jnp.float32, -bound, bound)
        b = jax.random.uniform(kb, (out_f,), jnp.float32, -bound, bound)
        params.append((w, b))
    return params


def ref_forward(x, params):
    """Pure-JAX reference with exact torch semantics (clamp on the norm)."""
    h = x
    for (w, b) in params:
        n = jnp.sqrt(jnp.sum(h * h, axis=1, keepdims=True))
        hd = h / jnp.maximum(n, 1e-12)
        h = jnp.maximum(hd @ w.T + b[None, :], 0.0)
    return h


# TODO(synk): Layer.train / Net.train (Adam training loops) and Net.predict
# (per-label goodness argmax) are training/eval procedures outside the forward
# pass and are not translated.

if __name__ == "__main__":
    # Small shapes consistent with the module: dims = [32, 64, 32], batch = 8
    dims = [32, 64, 32]
    batch = 8

    key = jax.random.PRNGKey(0)
    key, kx = jax.random.split(key)
    x = jax.random.normal(kx, (batch, dims[0]), jnp.float32)

    params = init_net_params(dims, jax.random.PRNGKey(0))

    net = PallasNet(params)          # one-time weight prep + jitted wrapper
    out = jax.block_until_ready(net(x))

    ref = ref_forward(x, params)
    assert out.shape == (batch, dims[-1])
    assert jnp.allclose(out, ref, atol=1e-5, rtol=1e-5)

    print("KERNEL_OK")
</pallas_src>

<mosaic_0001>
module attributes {stable_mosaic.version = 11 : i64} {
  func.func @kernel(%arg0: i32, %arg1: memref<8x128xf32, #tpu.memory_space<vmem>>, %arg2: memref<128x128xf32, #tpu.memory_space<vmem>>, %arg3: memref<1x128xf32, #tpu.memory_space<vmem>>, %arg4: memref<128x128xf32, #tpu.memory_space<vmem>>, %arg5: memref<1x128xf32, #tpu.memory_space<vmem>>, %arg6: memref<8x128xf32, #tpu.memory_space<vmem>>) attributes {dimension_semantics = [#tpu.dimension_semantics<parallel>], iteration_bounds = array<i64: 1>, scalar_prefetch = 0 : i64, scratch_operands = 0 : i64, tpu.core_type = #tpu.core_type<tc>, window_params = [{transform_indices = @transform_0, window_bounds = array<i64: 8, 128>}, {pipeline_mode = #tpu.pipeline_mode<synchronous>, transform_indices = @transform_1, window_bounds = array<i64: 128, 128>}, {pipeline_mode = #tpu.pipeline_mode<synchronous>, transform_indices = @transform_2, window_bounds = array<i64: 1, 128>}, {pipeline_mode = #tpu.pipeline_mode<synchronous>, transform_indices = @transform_3, window_bounds = array<i64: 128, 128>}, {pipeline_mode = #tpu.pipeline_mode<synchronous>, transform_indices = @transform_4, window_bounds = array<i64: 1, 128>}, {transform_indices = @transform_5, window_bounds = array<i64: 8, 128>}]} {
    %c0 = arith.constant 0 : index
    %c0_0 = arith.constant 0 : index
    %0 = vector.load %arg1[%c0, %c0_0] : memref<8x128xf32, #tpu.memory_space<vmem>>, vector<8x128xf32>
    %1 = arith.mulf %0, %0 : vector<8x128xf32>
    %cst = arith.constant dense<0.000000e+00> : vector<8xf32>
    %2 = vector.multi_reduction <add>, %1, %cst [1] : vector<8x128xf32> to vector<8xf32>
    %3 = vector.shape_cast %2 : vector<8xf32> to vector<8x1xf32>
    %cst_1 = arith.constant 1.000000e-24 : f32
    %4 = vector.broadcast %cst_1 : f32 to vector<8x1xf32>
    %5 = arith.maximumf %3, %4 : vector<8x1xf32>
    %6 = math.rsqrt %5 : vector<8x1xf32>
    %c0_2 = arith.constant 0 : index
    %c0_3 = arith.constant 0 : index
    %7 = vector.load %arg2[%c0_2, %c0_3] : memref<128x128xf32, #tpu.memory_space<vmem>>, vector<128x128xf32>
    %cst_4 = arith.constant dense<0.000000e+00> : vector<8x128xf32>
    %8 = tpu.matmul %0, %7, %cst_4 {dimension_numbers = #tpu.dot_dimension_numbers<[1], [0], [0], [1], [0, 0, 1, 1], [], []>} : vector<8x128xf32>, vector<128x128xf32>, vector<8x128xf32> -> vector<8x128xf32>
    %9 = vector.broadcast %6 : vector<8x1xf32> to vector<8x128xf32>
    %10 = arith.mulf %8, %9 : vector<8x128xf32>
    %c0_5 = arith.constant 0 : index
    %c0_6 = arith.constant 0 : index
    %11 = vector.load %arg3[%c0_5, %c0_6] : memref<1x128xf32, #tpu.memory_space<vmem>>, vector<1x128xf32>
    %12 = vector.broadcast %11 : vector<1x128xf32> to vector<8x128xf32>
    %13 = arith.addf %10, %12 : vector<8x128xf32>
    %cst_7 = arith.constant 0.000000e+00 : f32
    %14 = vector.broadcast %cst_7 : f32 to vector<8x128xf32>
    %15 = arith.maximumf %13, %14 : vector<8x128xf32>
    %16 = arith.mulf %15, %15 : vector<8x128xf32>
    %cst_8 = arith.constant dense<0.000000e+00> : vector<8xf32>
    %17 = vector.multi_reduction <add>, %16, %cst_8 [1] : vector<8x128xf32> to vector<8xf32>
    %18 = vector.shape_cast %17 : vector<8xf32> to vector<8x1xf32>
    %cst_9 = arith.constant 1.000000e-24 : f32
    %19 = vector.broadcast %cst_9 : f32 to vector<8x1xf32>
    %20 = arith.maximumf %18, %19 : vector<8x1xf32>
    %21 = math.rsqrt %20 : vector<8x1xf32>
    %c0_10 = arith.constant 0 : index
    %c0_11 = arith.constant 0 : index
    %22 = vector.load %arg4[%c0_10, %c0_11] : memref<128x128xf32, #tpu.memory_space<vmem>>, vector<128x128xf32>
    %cst_12 = arith.constant dense<0.000000e+00> : vector<8x128xf32>
    %23 = tpu.matmul %15, %22, %cst_12 {dimension_numbers = #tpu.dot_dimension_numbers<[1], [0], [0], [1], [0, 0, 1, 1], [], []>} : vector<8x128xf32>, vector<128x128xf32>, vector<8x128xf32> -> vector<8x128xf32>
    %24 = vector.broadcast %21 : vector<8x1xf32> to vector<8x128xf32>
    %25 = arith.mulf %23, %24 : vector<8x128xf32>
    %c0_13 = arith.constant 0 : index
    %c0_14 = arith.constant 0 : index
    %26 = vector.load %arg5[%c0_13, %c0_14] : memref<1x128xf32, #tpu.memory_space<vmem>>, vector<1x128xf32>
    %27 = vector.broadcast %26 : vector<1x128xf32> to vector<8x128xf32>
    %28 = arith.addf %25, %27 : vector<8x128xf32>
    %cst_15 = arith.constant 0.000000e+00 : f32
    %29 = vector.broadcast %cst_15 : f32 to vector<8x128xf32>
    %30 = arith.maximumf %28, %29 : vector<8x128xf32>
    %c0_16 = arith.constant 0 : index
    %c0_17 = arith.constant 0 : index
    %31 = vector.load %arg6[%c0_16, %c0_17] : memref<8x128xf32, #tpu.memory_space<vmem>>, vector<8x128xf32>
    tpu.vector_store %arg6[%c0_16, %c0_17], %30 {strides = array<i32>} : memref<8x128xf32, #tpu.memory_space<vmem>>, vector<8x128xf32>,
    return
  }
  func.func @transform_0(%arg0: i32) -> (i32, i32) {
    %c0_i32 = arith.constant 0 : i32
    %c0_i32_0 = arith.constant 0 : i32
    return %arg0, %c0_i32 : i32, i32
  }
  func.func @transform_1(%arg0: i32) -> (i32, i32) {
    %c0_i32 = arith.constant 0 : i32
    %c0_i32_0 = arith.constant 0 : i32
    %c0_i32_1 = arith.constant 0 : i32
    return %c0_i32, %c0_i32_0 : i32, i32
  }
  func.func @transform_2(%arg0: i32) -> (i32, i32) {
    %c0_i32 = arith.constant 0 : i32
    %c0_i32_0 = arith.constant 0 : i32
    %c0_i32_1 = arith.constant 0 : i32
    return %c0_i32, %c0_i32_0 : i32, i32
  }
  func.func @transform_3(%arg0: i32) -> (i32, i32) {
    %c0_i32 = arith.constant 0 : i32
    %c0_i32_0 = arith.constant 0 : i32
    %c0_i32_1 = arith.constant 0 : i32
    return %c0_i32, %c0_i32_0 : i32, i32
  }
  func.func @transform_4(%arg0: i32) -> (i32, i32) {
    %c0_i32 = arith.constant 0 : i32
    %c0_i32_0 = arith.constant 0 : i32
    %c0_i32_1 = arith.constant 0 : i32
    return %c0_i32, %c0_i32_0 : i32, i32
  }
  func.func @transform_5(%arg0: i32) -> (i32, i32) {
    %c0_i32 = arith.constant 0 : i32
    %c0_i32_0 = arith.constant 0 : i32
    return %arg0, %c0_i32 : i32, i32
  }
}

</mosaic_0001>

<llo_original>
// kernel: _forward.1
$region0: #{_forward.1}
  #allocation0 [shape = 'u32[]', space=smem, size = 0x4, offset = 0x4, fixed_abs, tag = 'smem constant byte address 0x4 - core index']
  #allocation1 [shape = 'u32[144,128]{1,0:T(1,128)}', space=vmem, size = 0x12000, scoped, tag = 'internal scratch']
  %s0 = inlined_call_operand.vmem [shape: f32[8,128], index: 0, kind: input, shape index: {}]
  %s1 = inlined_call_operand.hbm [shape: f32[128,128], index: 1, kind: input, shape index: {}]
  %s2 = inlined_call_operand.vmem [shape: f32[1,128], index: 2, kind: input, shape index: {}]
  %s3 = inlined_call_operand.hbm [shape: f32[128,128], index: 3, kind: input, shape index: {}]
  %s4 = inlined_call_operand.vmem [shape: f32[1,128], index: 4, kind: input, shape index: {}]
  %s5 = inlined_call_operand.hbm [shape: f32[8,128], index: 5, kind: output, shape index: {}]
  %s6 = sld [smem:[#allocation0]]
  $region38: #{_forward.1} parent=0
    _
  %s8 = ssub.s32 1, %s6
  %s9 = scalar_select 0, %s8, %s6
  $region1: #{_forward.1} parent=0
    #allocation2 [shape = 'u8[65536]{0}', space=vmem, size = 0x10000, scoped, tag = 'input window, operand 1, single buffered']
    #allocation3 [shape = 's32[1]{0}', space=sflag, size = 0x4, scoped, tag = 'scoped memory for _forward.1']
    #allocation4 [shape = 's32[1]{0}', space=sflag, size = 0x4, scoped, tag = 'scoped memory for _forward.1']
    #allocation5 [shape = 'u8[65536]{0}', space=vmem, size = 0x10000, scoped, tag = 'input window, operand 3, single buffered']
    #allocation6 [shape = 's32[1]{0}', space=sflag, size = 0x4, scoped, tag = 'scoped memory for _forward.1']
    #allocation7 [shape = 'u8[4096]{0}', space=vmem, size = 0x1000, scoped, tag = 'output window, operand 0, single buffered']
    %10 = vsyncpa [#allocation3], 0
    %11 = vsyncpa [#allocation6], 0
    %12 = vsyncpa [#allocation4], 0
    // Predicated region
    $region2: #{_forward.1} parent=1 // pred_check
      _
    $region3: #{_forward.1} parent=1 // pred_check_branch
      %14 = sbr.rel (0) target = $region5
    $region4: #{_forward.1} parent=1 // pred_region
      _
    $region5: #{_forward.1} parent=1 // pred_fallthru
      _
    // Predicated region
    $region6: #{_forward.1} parent=1 // pred_check
      _
    $region7: #{_forward.1} parent=1 // pred_check_branch
      %16 = sbr.rel (0) target = $region9
    $region8: #{_forward.1} parent=1 // pred_region
      %s18 = ssub.s32 2048, 2048
      %19 = vsyncadd [#allocation3], %s18
      %s20 = sshll.u32 [#allocation2], 4
      %s21 = int_to_ptr.vmem [resolvable:$true] %s20
      %26 = dma.hbm_to_vmem [thread:$0]  %s1, 2048, %s21, [#allocation3], 128, 128, 8
    $region9: #{_forward.1} parent=1 // pred_fallthru
      _
    // Predicated region
    $region10: #{_forward.1} parent=1 // pred_check
      _
    $region11: #{_forward.1} parent=1 // pred_check_branch
      %28 = sbr.rel (0) target = $region13
    $region12: #{_forward.1} parent=1 // pred_region
      _
    $region13: #{_forward.1} parent=1 // pred_fallthru
      _
    // Predicated region
    $region14: #{_forward.1} parent=1 // pred_check
      _
    $region15: #{_forward.1} parent=1 // pred_check_branch
      %30 = sbr.rel (0) target = $region17
    $region16: #{_forward.1} parent=1 // pred_region
      %s32 = ssub.s32 2048, 2048
      %33 = vsyncadd [#allocation6], %s32
      %s34 = sshll.u32 [#allocation5], 4
      %s35 = int_to_ptr.vmem [resolvable:$true] %s34
      %40 = dma.hbm_to_vmem [thread:$0]  %s3, 2048, %s35, [#allocation6], 128, 128, 8
    $region17: #{_forward.1} parent=1 // pred_fallthru
      _
    // Predicated region
    $region18: #{_forward.1} parent=1 // pred_check
      _
    $region19: #{_forward.1} parent=1 // pred_check_branch
      %42 = sbr.rel (0) target = $region21
    $region20: #{_forward.1} parent=1 // pred_region
      _
    $region21: #{_forward.1} parent=1 // pred_fallthru
      _
    // Predicated region
    $region22: #{_forward.1} parent=1 // pred_check
      _
    $region23: #{_forward.1} parent=1 // pred_check_branch
      %44 = sbr.rel (0) target = $region25
    $region24: #{_forward.1} parent=1 // pred_region
      %45 = dma.done [#allocation3], 2048
    $region25: #{_forward.1} parent=1 // pred_fallthru
      _
    // Predicated region
    $region26: #{_forward.1} parent=1 // pred_check
      _
    $region27: #{_forward.1} parent=1 // pred_check_branch
      %47 = sbr.rel (0) target = $region29
    $region28: #{_forward.1} parent=1 // pred_region
      %48 = dma.done [#allocation6], 2048
    $region29: #{_forward.1} parent=1 // pred_fallthru
      _
    %v49 = vld [vmem:[%s0] sm:$0xff]
    %v50 = vmul.f32 %v49, %v49
    %51 = vadd.xlane.f32.xlu0 %v50
    %v52 = vpop.xlane.xlu0 %51
    %v53 = vmax.f32 %v52, 1e-24
    %v54 = vrsqrt.pop %v53
    %v55 = vld [vmem:[#allocation2] sm:$0xff]
    %v56 = vld [vmem:[#allocation2 + $0x8] sm:$0xff]
    %v57 = vld [vmem:[#allocation2 + $0x10] sm:$0xff]
    %v58 = vld [vmem:[#allocation2 + $0x18] sm:$0xff]
    %v59 = vld [vmem:[#allocation2 + $0x20] sm:$0xff]
    %v60 = vld [vmem:[#allocation2 + $0x28] sm:$0xff]
    %v61 = vld [vmem:[#allocation2 + $0x30] sm:$0xff]
    %v62 = vld [vmem:[#allocation2 + $0x38] sm:$0xff]
    %v63 = vld [vmem:[#allocation2 + $0x40] sm:$0xff]
    %v64 = vld [vmem:[#allocation2 + $0x48] sm:$0xff]
    %v65 = vld [vmem:[#allocation2 + $0x50] sm:$0xff]
    %v66 = vld [vmem:[#allocation2 + $0x58] sm:$0xff]
    %v67 = vld [vmem:[#allocation2 + $0x60] sm:$0xff]
    %v68 = vld [vmem:[#allocation2 + $0x68] sm:$0xff]
    %v69 = vld [vmem:[#allocation2 + $0x70] sm:$0xff]
    %v70 = vld [vmem:[#allocation2 + $0x78] sm:$0xff]
    %71 = vmatprep.subr.mxu0 0.0
    %72 = vmatpush1.msra.mxu0 %v70
    %73 = vmatprep.subr.mxu0 0.0
    %74 = vmatpush1.msra.mxu0 %v69
    %75 = vmatprep.subr.mxu0 0.0
    %76 = vmatpush1.msra.mxu0 %v68
    %77 = vmatprep.subr.mxu0 0.0
    %78 = vmatpush1.msra.mxu0 %v67
    %79 = vmatprep.subr.mxu0 0.0
    %80 = vmatpush1.msra.mxu0 %v66
    %81 = vmatprep.subr.mxu0 0.0
    %82 = vmatpush1.msra.mxu0 %v65
    %83 = vmatprep.subr.mxu0 0.0
    %84 = vmatpush1.msra.mxu0 %v64
    %85 = vmatprep.subr.mxu0 0.0
    %86 = vmatpush1.msra.mxu0 %v63
    %87 = vmatprep.subr.mxu0 0.0
    %88 = vmatpush1.msra.mxu0 %v62
    %89 = vmatprep.subr.mxu0 0.0
    %90 = vmatpush1.msra.mxu0 %v61
    %91 = vmatprep.subr.mxu0 0.0
    %92 = vmatpush1.msra.mxu0 %v60
    %93 = vmatprep.subr.mxu0 0.0
    %94 = vmatpush1.msra.mxu0 %v59
    %95 = vmatprep.subr.mxu0 0.0
    %96 = vmatpush1.msra.mxu0 %v58
    %97 = vmatprep.subr.mxu0 0.0
    %98 = vmatpush1.msra.mxu0 %v57
    %99 = vmatprep.subr.mxu0 0.0
    %100 = vmatpush1.msra.mxu0 %v56
    %101 = vmatprep.subr.mxu0 0.0
    %102 = vmatpush1.msra.mxu0 %v55
    %103 = vmatprep.subr.mxu0 0.0
    %104 = vmatpush2.msra.mxu0 0.0
    %105 = vmatprep.subr.mxu0 0.0
    %106 = vmatpush2.msra.mxu0 0.0
    %107 = vmatprep.subr.mxu0 0.0
    %108 = vmatpush2.msra.mxu0 0.0
    %109 = vmatprep.subr.mxu0 0.0
    %110 = vmatpush2.msra.mxu0 0.0
    %111 = vmatprep.subr.mxu0 0.0
    %112 = vmatpush2.msra.mxu0 0.0
    %113 = vmatprep.subr.mxu0 0.0
    %114 = vmatpush2.msra.mxu0 0.0
    %115 = vmatprep.subr.mxu0 0.0
    %116 = vmatpush2.msra.mxu0 0.0
    %117 = vmatprep.subr.mxu0 0.0
    %118 = vmatpush2.msra.mxu0 0.0
    %119 = vmatprep.subr.mxu0 0.0
    %120 = vmatpush2.msra.mxu0 0.0
    %121 = vmatprep.subr.mxu0 0.0
    %122 = vmatpush2.msra.mxu0 0.0
    %123 = vmatprep.subr.mxu0 0.0
    %124 = vmatpush2.msra.mxu0 0.0
    %125 = vmatprep.subr.mxu0 0.0
    %126 = vmatpush2.msra.mxu0 0.0
    %127 = vmatprep.subr.mxu0 0.0
    %128 = vmatpush2.msra.mxu0 0.0
    %129 = vmatprep.subr.mxu0 0.0
    %130 = vmatpush2.msra.mxu0 0.0
    %131 = vmatprep.subr.mxu0 0.0
    %132 = vmatpush2.msra.mxu0 0.0
    %133 = vmatprep.subr.mxu0 0.0
    %134 = vmatpush2.msra.mxu0 0.0
    %135 = vmatprep.mubr.f32.mxu0 0.0
    %136 = vmatmul.mubr.f32.gmra.mxu0 %v49
    %v137 = vpop.f32.mrf.mxu0
    %v138 = vadd.f32 0.0, %v137
    %v139 = vpop.f32.mrf.mxu0
    %140 = vdwg.mxu0
    %v141 = vmul.f32 %v138, %v54
    %v142 = vld [vmem:[%s2] sm:$0x1]
    %v144 = vlaneseq
    %v145 = vshrl.u32 %v144, 7
    %v146 = vsub.s32 0, %v145
    %v147 = vrot.slane %v142, %v146
    %v149 = vadd.f32 %v141, %v147
    %v150 = vmax.f32 %v149, 0.0
    %v151 = vmul.f32 %v150, %v150
    %152 = vadd.xlane.f32.xlu0 %v151
    %v153 = vpop.xlane.xlu0 %152
    %v154 = vmax.f32 %v153, 1e-24
    %v155 = vrsqrt.pop %v154
    %v156 = vld [vmem:[#allocation5] sm:$0xff]
    %v157 = vld [vmem:[#allocation5 + $0x8] sm:$0xff]
    %v158 = vld [vmem:[#allocation5 + $0x10] sm:$0xff]
    %v159 = vld [vmem:[#allocation5 + $0x18] sm:$0xff]
    %v160 = vld [vmem:[#allocation5 + $0x20] sm:$0xff]
    %v161 = vld [vmem:[#allocation5 + $0x28] sm:$0xff]
    %v162 = vld [vmem:[#allocation5 + $0x30] sm:$0xff]
    %v163 = vld [vmem:[#allocation5 + $0x38] sm:$0xff]
    %v164 = vld [vmem:[#allocation5 + $0x40] sm:$0xff]
    %v165 = vld [vmem:[#allocation5 + $0x48] sm:$0xff]
    %v166 = vld [vmem:[#allocation5 + $0x50] sm:$0xff]
    %v167 = vld [vmem:[#allocation5 + $0x58] sm:$0xff]
    %v168 = vld [vmem:[#allocation5 + $0x60] sm:$0xff]
    %v169 = vld [vmem:[#allocation5 + $0x68] sm:$0xff]
    %v170 = vld [vmem:[#allocation5 + $0x70] sm:$0xff]
    %v171 = vld [vmem:[#allocation5 + $0x78] sm:$0xff]
    %172 = vmatprep.subr.mxu0 0.0
    %173 = vmatpush1.msra.mxu0 %v171
    %174 = vmatprep.subr.mxu0 0.0
    %175 = vmatpush1.msra.mxu0 %v170
    %176 = vmatprep.subr.mxu0 0.0
    %177 = vmatpush1.msra.mxu0 %v169
    %178 = vmatprep.subr.mxu0 0.0
    %179 = vmatpush1.msra.mxu0 %v168
    %180 = vmatprep.subr.mxu0 0.0
    %181 = vmatpush1.msra.mxu0 %v167
    %182 = vmatprep.subr.mxu0 0.0
    %183 = vmatpush1.msra.mxu0 %v166
    %184 = vmatprep.subr.mxu0 0.0
    %185 = vmatpush1.msra.mxu0 %v165
    %186 = vmatprep.subr.mxu0 0.0
    %187 = vmatpush1.msra.mxu0 %v164
    %188 = vmatprep.subr.mxu0 0.0
    %189 = vmatpush1.msra.mxu0 %v163
    %190 = vmatprep.subr.mxu0 0.0
    %191 = vmatpush1.msra.mxu0 %v162
    %192 = vmatprep.subr.mxu0 0.0
    %193 = vmatpush1.msra.mxu0 %v161
    %194 = vmatprep.subr.mxu0 0.0
    %195 = vmatpush1.msra.mxu0 %v160
    %196 = vmatprep.subr.mxu0 0.0
    %197 = vmatpush1.msra.mxu0 %v159
    %198 = vmatprep.subr.mxu0 0.0
    %199 = vmatpush1.msra.mxu0 %v158
    %200 = vmatprep.subr.mxu0 0.0
    %201 = vmatpush1.msra.mxu0 %v157
    %202 = vmatprep.subr.mxu0 0.0
    %203 = vmatpush1.msra.mxu0 %v156
    %204 = vmatprep.subr.mxu0 0.0
    %205 = vmatpush2.msra.mxu0 0.0
    %206 = vmatprep.subr.mxu0 0.0
    %207 = vmatpush2.msra.mxu0 0.0
    %208 = vmatprep.subr.mxu0 0.0
    %209 = vmatpush2.msra.mxu0 0.0
    %210 = vmatprep.subr.mxu0 0.0
    %211 = vmatpush2.msra.mxu0 0.0
    %212 = vmatprep.subr.mxu0 0.0
    %213 = vmatpush2.msra.mxu0 0.0
    %214 = vmatprep.subr.mxu0 0.0
    %215 = vmatpush2.msra.mxu0 0.0
    %216 = vmatprep.subr.mxu0 0.0
    %217 = vmatpush2.msra.mxu0 0.0
    %218 = vmatprep.subr.mxu0 0.0
    %219 = vmatpush2.msra.mxu0 0.0
    %220 = vmatprep.subr.mxu0 0.0
    %221 = vmatpush2.msra.mxu0 0.0
    %222 = vmatprep.subr.mxu0 0.0
    %223 = vmatpush2.msra.mxu0 0.0
    %224 = vmatprep.subr.mxu0 0.0
    %225 = vmatpush2.msra.mxu0 0.0
    %226 = vmatprep.subr.mxu0 0.0
    %227 = vmatpush2.msra.mxu0 0.0
    %228 = vmatprep.subr.mxu0 0.0
    %229 = vmatpush2.msra.mxu0 0.0
    %230 = vmatprep.subr.mxu0 0.0
    %231 = vmatpush2.msra.mxu0 0.0
    %232 = vmatprep.subr.mxu0 0.0
    %233 = vmatpush2.msra.mxu0 0.0
    %234 = vmatprep.subr.mxu0 0.0
    %235 = vmatpush2.msra.mxu0 0.0
    %236 = vmatprep.mubr.f32.mxu0 0.0
    %237 = vmatmul.mubr.f32.gmra.mxu0 %v150
    %v238 = vpop.f32.mrf.mxu0
    %v239 = vadd.f32 0.0, %v238
    %v240 = vpop.f32.mrf.mxu0
    %241 = vdwg.mxu0
    %v242 = vmul.f32 %v239, %v155
    %v243 = vld [vmem:[%s4] sm:$0x1]
    %v245 = vlaneseq
    %v246 = vshrl.u32 %v245, 7
    %v247 = vsub.s32 0, %v246
    %v248 = vrot.slane %v243, %v247
    %v250 = vadd.f32 %v242, %v248
    %v251 = vmax.f32 %v250, 0.0
    %252 = vst [vmem:[#allocation7] sm:$0xff] %v251
    // Predicated region
    $region30: #{_forward.1} parent=1 // pred_check
      _
    $region31: #{_forward.1} parent=1 // pred_check_branch
      %254 = sbr.rel (0) target = $region33
    $region32: #{_forward.1} parent=1 // pred_region
      %s256 = ssub.s32 128, 128
      %257 = vsyncadd [#allocation4], %s256
      %s259 = sshll.u32 [#allocation7], 4
      %s260 = int_to_ptr.vmem [resolvable:$true] %s259
      %262 = dma.vmem_to_hbm [thread:$0]  %s260, 128, %s5, [#allocation4]
    $region33: #{_forward.1} parent=1 // pred_fallthru
      _
    // Predicated region
    $region34: #{_forward.1} parent=1 // pred_check
      _
    $region35: #{_forward.1} parent=1 // pred_check_branch
      %264 = sbr.rel (0) target = $region37
    $region36: #{_forward.1} parent=1 // pred_region
      %265 = dma.done [#allocation4], 128
    $region37: #{_forward.1} parent=1 // pred_fallthru
      _
    %266 = vsyncpa [#allocation3], 1
    %267 = vsyncpa [#allocation6], 1
    %268 = vsyncpa [#allocation4], 1

</llo_original>
